<compile_context>
chip_gen: v7x
topology: tpu7x:2x2x1
jax: 0.10.0
libtpu: 0.0.40
codegen_flags: <defaults>
</compile_context>

<pallas_src>
import jax
import jax.numpy as jnp
from jax import lax
from jax.experimental import pallas as pl
from jax.experimental.pallas import tpu as pltpu


# ----------------------------- kernel -------------------------------------- #

def _make_pa_kernel(red, use_mxu, shared_input):
    """Build the fused PALayer kernel.

    shared_input=True  -> attention is computed from x itself (seg=None path),
                          so x is streamed from HBM only once.
    use_mxu=True       -> the Cs-contraction of the first 1x1 conv runs on the
                          MXU; otherwise it is an exact-f32 VPU broadcast-MAC
                          + XLU sublane reduction (better for tiny red*Cs).
    """

    def attention(s, w1, b1c, w2c, b2_smem):
        # s: (Cs, T) f32 source tile, lanes = spatial.
        t = s.shape[-1]
        if use_mxu:
            # (red, Cs) @ (Cs, T) on the MXU; bias/relu on VPU; the tiny
            # (red -> 1) collapse stays on VPU/XLU; sigmoid on EUP.
            h = jnp.dot(w1, s, preferred_element_type=jnp.float32)   # (red, T)
            h = jnp.maximum(h + b1c, 0.0)
            logit = jnp.sum(w2c * h, axis=0, keepdims=True)          # (1, T)
        else:
            # red*Cs is tiny: static unroll, exact f32, MXU left idle.
            logit = jnp.zeros((1, t), jnp.float32)
            for r in range(red):
                hr = jnp.sum(w1[:, r:r + 1] * s, axis=0, keepdims=True)  # (1,T)
                hr = jnp.maximum(hr + b1c[r:r + 1, :], 0.0)
                logit = logit + w2c[r:r + 1, :] * hr
        return jax.nn.sigmoid(logit + b2_smem[0])                    # (1, T)

    if shared_input:
        def kernel(x_ref, w1_ref, b1_ref, w2_ref, b2_ref, o_ref):
            x = x_ref[0]                                             # (C, T)
            pa = attention(x.astype(jnp.float32), w1_ref[...],
                           b1_ref[...], w2_ref[...], b2_ref)
            o_ref[0] = (x * pa).astype(o_ref.dtype)
    else:
        def kernel(x_ref, seg_ref, w1_ref, b1_ref, w2_ref, b2_ref, o_ref):
            x = x_ref[0]                                             # (C,  T)
            s = seg_ref[0].astype(jnp.float32)                       # (Cs, T)
            pa = attention(s, w1_ref[...], b1_ref[...], w2_ref[...], b2_ref)
            o_ref[0] = (x * pa).astype(o_ref.dtype)

    return kernel


# ----------------------------- tiling -------------------------------------- #

def _pick_tile(hw, n, c_max, itemsize):
    """Pick the HW (lane) tile: a multiple of 128, as large as a ~2 MiB
    per-stream VMEM budget allows (fits every generation's scoped-VMEM default
    with double buffering), preferring a tile that divides the padded extent,
    while keeping enough grid steps to shard across v7x's two TensorCores."""
    per_stream_bytes = 2 * 1024 * 1024
    hw128 = -(-hw // 128) * 128
    t = max(128, (per_stream_bytes // (itemsize * c_max)) // 128 * 128)
    t = min(t, hw128)
    # Prefer a divisor of the 128-padded extent (zero right-padding) as long
    # as it is not much smaller than the VMEM-derived tile.
    d = hw128 // 128
    div = max((k for k in range(1, d + 1) if d % k == 0 and k * 128 <= t),
              default=1) * 128
    if div * 2 >= t:
        t = div
    # Keep >= ~8 total grid steps when possible (2 TCs on v7x + DMA hiding).
    while t > 128 and n * (-(-hw128 // t)) < 8:
        t = max(128, (t // 2) // 128 * 128)
    hw_pad = -(-hw128 // t) * t
    return t, hw_pad


# ----------------------------- wrapper -------------------------------------- #

def _pa_call(x, seg, w1, b1, w2, b2):
    """Fused PALayer.  `seg=None` reproduces the PyTorch seg=None branch and
    streams x from HBM only once."""
    n, c, h, w = x.shape
    hw = h * w
    red = w1.shape[0]
    cs = c if seg is None else seg.shape[1]
    itemsize = jnp.dtype(x.dtype).itemsize

    t, hw_pad = _pick_tile(hw, n, max(c, cs), itemsize)

    # Lane-dense flattening (no transposes): channels -> sublanes, HW -> lanes.
    # Right-pad HW to a multiple of the tile; padded lanes multiply zero-padded
    # x, so the output padding is zero and gets sliced off below.
    def flat(a):
        a = a.reshape(a.shape[0], a.shape[1], hw)
        if hw_pad != hw:
            a = jnp.pad(a, ((0, 0), (0, 0), (0, hw_pad - hw)))
        return a

    x_flat = flat(x)

    # MXU only when the contraction is big enough to beat push/pop latency and
    # the <red-of-256-result-rows utilization (production C=64/red=8 case, the
    # one where v7x's HBM bandwidth can make the VALU slot the bottleneck).
    use_mxu = red * cs >= 256

    w1_2d = w1[:, :, 0, 0].astype(jnp.float32)                # (red, Cs)
    w1_mat = w1_2d if use_mxu else w1_2d.T                    # (red,Cs)/(Cs,red)
    b1_col = b1.astype(jnp.float32).reshape(red, 1)
    w2_col = w2[:, :, 0, 0].astype(jnp.float32).reshape(red, 1)
    b2_vec = b2.astype(jnp.float32).reshape(1)                # scalar -> SMEM

    grid = (n, hw_pad // t)
    big_spec = pl.BlockSpec((1, c, t), lambda i, j: (i, 0, j))
    small = lambda shape: pl.BlockSpec(shape, lambda i, j: (0, 0))

    in_arrays = [x_flat]
    in_specs = [big_spec]
    if seg is not None:
        in_arrays.append(flat(seg))
        in_specs.append(pl.BlockSpec((1, cs, t), lambda i, j: (i, 0, j)))
    in_arrays += [w1_mat, b1_col, w2_col, b2_vec]
    in_specs += [small(w1_mat.shape), small((red, 1)), small((red, 1)),
                 pl.BlockSpec(memory_space=pltpu.MemorySpace.SMEM)]

    out_flat = pl.pallas_call(
        _make_pa_kernel(red, use_mxu, shared_input=(seg is None)),
        out_shape=jax.ShapeDtypeStruct((n, c, hw_pad), x.dtype),
        grid=grid,
        in_specs=in_specs,
        out_specs=big_spec,
        compiler_params=pltpu.CompilerParams(
            dimension_semantics=("parallel", "parallel")),
    )(*in_arrays)

    return out_flat[:, :, :hw].reshape(n, c, h, w)


@jax.jit
def _pa_forward_self(x, w1, b1, w2, b2):
    return _pa_call(x, None, w1, b1, w2, b2)


@jax.jit
def _pa_forward_seg(x, seg, w1, b1, w2, b2):
    return _pa_call(x, seg, w1, b1, w2, b2)


def pa_layer_forward(x, w1, b1, w2, b2, seg=None):
    """PALayer forward.  `seg=None` (or seg aliasing x) computes the attention
    map from x itself and streams x from HBM only once."""
    if seg is None or seg is x:
        return _pa_forward_self(x, w1, b1, w2, b2)
    return _pa_forward_seg(x, seg, w1, b1, w2, b2)


# ----------------------------- reference ------------------------------------ #

def _ref_pa(x, seg, w1, b1, w2, b2):
    inp = x if seg is None else seg

    def conv1x1(v, w, b):
        y = lax.conv_general_dilated(
            v, w, (1, 1), 'VALID',
            dimension_numbers=('NCHW', 'OIHW', 'NCHW'),
            precision=lax.Precision.HIGHEST)
        return y + b[None, :, None, None]

    hid = jax.nn.relu(conv1x1(inp, w1, b1))
    y = jax.nn.sigmoid(conv1x1(hid, w2, b2))
    return x * y


# ------------------------------- main ---------------------------------------- #

if __name__ == "__main__":
    key = jax.random.PRNGKey(0)

    def make_case(k, n, c, h, w, dtype=jnp.float32):
        red = max(c // 8, 1)
        ks = jax.random.split(k, 6)
        init = lambda kk, s, sc=0.1: jax.random.normal(kk, s, jnp.float32) * sc
        w1 = init(ks[0], (red, c, 1, 1))      # pa.0 weight
        b1 = init(ks[1], (red,))              # pa.0 bias
        w2 = init(ks[2], (1, red, 1, 1))      # pa.2 weight
        b2 = init(ks[3], (1,))                # pa.2 bias
        x = jax.random.normal(ks[4], (n, c, h, w), jnp.float32).astype(dtype)
        seg = jax.random.normal(ks[5], (n, c, h, w), jnp.float32).astype(dtype)
        return x, seg, w1, b1, w2, b2

    k1, k2, k3 = jax.random.split(key, 3)

    # --- small channels (C=16, red=2): exact-f32 VPU attention path ---
    x, seg, w1, b1, w2, b2 = make_case(k1, 2, 16, 16, 16)
    out = jax.block_until_ready(pa_layer_forward(x, w1, b1, w2, b2, seg=seg))
    ref = _ref_pa(x, seg, w1, b1, w2, b2)
    assert out.shape == x.shape and out.dtype == x.dtype
    assert jnp.allclose(out, ref, rtol=1e-5, atol=1e-5), "mismatch (seg branch)"

    # seg=None branch: attention from x itself, x streamed once.
    out2 = jax.block_until_ready(pa_layer_forward(x, w1, b1, w2, b2))
    ref2 = _ref_pa(x, None, w1, b1, w2, b2)
    assert jnp.allclose(out2, ref2, rtol=1e-5, atol=1e-5), "mismatch (seg=None branch)"

    # --- production-like channels (C=64, red=8): MXU attention path ---
    x3, seg3, w13, b13, w23, b23 = make_case(k2, 2, 64, 32, 32)
    out3 = jax.block_until_ready(pa_layer_forward(x3, w13, b13, w23, b23, seg=seg3))
    ref3 = _ref_pa(x3, seg3, w13, b13, w23, b23)
    # MXU f32 matmul may use multi-pass bf16 internally -> slightly looser tol.
    assert jnp.allclose(out3, ref3, rtol=1e-3, atol=1e-3), "mismatch (MXU path)"

    # --- bf16 I/O (halves HBM bytes; attention math stays f32 in-kernel) ---
    xb, segb, w1b, b1b, w2b, b2b = make_case(k3, 2, 16, 16, 16, dtype=jnp.bfloat16)
    out4 = jax.block_until_ready(pa_layer_forward(xb, w1b, b1b, w2b, b2b, seg=segb))
    ref4 = _ref_pa(xb.astype(jnp.float32), segb.astype(jnp.float32),
                   w1b, b1b, w2b, b2b)
    assert out4.dtype == jnp.bfloat16
    assert jnp.allclose(out4.astype(jnp.float32), ref4, rtol=2e-2, atol=2e-2), \
        "mismatch (bf16 I/O)"

    print("KERNEL_OK")
</pallas_src>

<mosaic_0001>
module attributes {stable_mosaic.version = 11 : i64} {
  func.func @kernel(%arg0: i32, %arg1: i32, %arg2: memref<1x16x128xf32, #tpu.memory_space<vmem>>, %arg3: memref<1x16x128xf32, #tpu.memory_space<vmem>>, %arg4: memref<16x2xf32, #tpu.memory_space<vmem>>, %arg5: memref<2x1xf32, #tpu.memory_space<vmem>>, %arg6: memref<2x1xf32, #tpu.memory_space<vmem>>, %arg7: memref<1xf32, #tpu.memory_space<smem>>, %arg8: memref<1x16x128xf32, #tpu.memory_space<vmem>>) attributes {dimension_semantics = [#tpu.dimension_semantics<parallel>, #tpu.dimension_semantics<parallel>], iteration_bounds = array<i64: 2, 2>, scalar_prefetch = 0 : i64, scratch_operands = 0 : i64, tpu.core_type = #tpu.core_type<tc>, window_params = [{transform_indices = @transform_0, window_bounds = array<i64: 1, 16, 128>}, {transform_indices = @transform_1, window_bounds = array<i64: 1, 16, 128>}, {pipeline_mode = #tpu.pipeline_mode<synchronous>, transform_indices = @transform_2, window_bounds = array<i64: 16, 2>}, {pipeline_mode = #tpu.pipeline_mode<synchronous>, transform_indices = @transform_3, window_bounds = array<i64: 2, 1>}, {pipeline_mode = #tpu.pipeline_mode<synchronous>, transform_indices = @transform_4, window_bounds = array<i64: 2, 1>}, {transform_indices = @transform_5, window_bounds = array<i64: 1>}, {transform_indices = @transform_6, window_bounds = array<i64: 1, 16, 128>}]} {
    %c0 = arith.constant 0 : index
    %c0_0 = arith.constant 0 : index
    %c0_1 = arith.constant 0 : index
    %0 = vector.load %arg2[%c0, %c0_0, %c0_1] : memref<1x16x128xf32, #tpu.memory_space<vmem>>, vector<1x16x128xf32>
    %1 = vector.shape_cast %0 : vector<1x16x128xf32> to vector<16x128xf32>
    %c0_2 = arith.constant 0 : index
    %c0_3 = arith.constant 0 : index
    %c0_4 = arith.constant 0 : index
    %2 = vector.load %arg3[%c0_2, %c0_3, %c0_4] : memref<1x16x128xf32, #tpu.memory_space<vmem>>, vector<1x16x128xf32>
    %3 = vector.shape_cast %2 : vector<1x16x128xf32> to vector<16x128xf32>
    %c0_5 = arith.constant 0 : index
    %c0_6 = arith.constant 0 : index
    %4 = vector.load %arg4[%c0_5, %c0_6] : memref<16x2xf32, #tpu.memory_space<vmem>>, vector<16x2xf32>
    %c0_7 = arith.constant 0 : index
    %c0_8 = arith.constant 0 : index
    %5 = vector.load %arg5[%c0_7, %c0_8] : memref<2x1xf32, #tpu.memory_space<vmem>>, vector<2x1xf32>
    %c0_9 = arith.constant 0 : index
    %c0_10 = arith.constant 0 : index
    %6 = vector.load %arg6[%c0_9, %c0_10] : memref<2x1xf32, #tpu.memory_space<vmem>>, vector<2x1xf32>
    %cst = arith.constant 0.000000e+00 : f32
    %7 = vector.broadcast %cst : f32 to vector<1x128xf32>
    %8 = vector.extract_strided_slice %4 {offsets = [0, 0], sizes = [16, 1], strides = [1, 1]} : vector<16x2xf32> to vector<16x1xf32>
    %9 = vector.broadcast %8 : vector<16x1xf32> to vector<16x128xf32>
    %10 = arith.mulf %9, %3 : vector<16x128xf32>
    %cst_11 = arith.constant dense<0.000000e+00> : vector<128xf32>
    %11 = vector.multi_reduction <add>, %10, %cst_11 [0] : vector<16x128xf32> to vector<128xf32>
    %12 = vector.shape_cast %11 : vector<128xf32> to vector<1x128xf32>
    %13 = vector.extract_strided_slice %5 {offsets = [0, 0], sizes = [1, 1], strides = [1, 1]} : vector<2x1xf32> to vector<1x1xf32>
    %14 = vector.broadcast %13 : vector<1x1xf32> to vector<1x128xf32>
    %15 = arith.addf %12, %14 : vector<1x128xf32>
    %cst_12 = arith.constant 0.000000e+00 : f32
    %16 = vector.broadcast %cst_12 : f32 to vector<1x128xf32>
    %17 = arith.maximumf %15, %16 : vector<1x128xf32>
    %18 = vector.extract_strided_slice %6 {offsets = [0, 0], sizes = [1, 1], strides = [1, 1]} : vector<2x1xf32> to vector<1x1xf32>
    %19 = vector.broadcast %18 : vector<1x1xf32> to vector<1x128xf32>
    %20 = arith.mulf %19, %17 : vector<1x128xf32>
    %21 = arith.addf %7, %20 : vector<1x128xf32>
    %22 = vector.extract_strided_slice %4 {offsets = [0, 1], sizes = [16, 1], strides = [1, 1]} : vector<16x2xf32> to vector<16x1xf32>
    %23 = vector.broadcast %22 : vector<16x1xf32> to vector<16x128xf32>
    %24 = arith.mulf %23, %3 : vector<16x128xf32>
    %cst_13 = arith.constant dense<0.000000e+00> : vector<128xf32>
    %25 = vector.multi_reduction <add>, %24, %cst_13 [0] : vector<16x128xf32> to vector<128xf32>
    %26 = vector.shape_cast %25 : vector<128xf32> to vector<1x128xf32>
    %27 = vector.extract_strided_slice %5 {offsets = [1, 0], sizes = [1, 1], strides = [1, 1]} : vector<2x1xf32> to vector<1x1xf32>
    %28 = vector.broadcast %27 : vector<1x1xf32> to vector<1x128xf32>
    %29 = arith.addf %26, %28 : vector<1x128xf32>
    %cst_14 = arith.constant 0.000000e+00 : f32
    %30 = vector.broadcast %cst_14 : f32 to vector<1x128xf32>
    %31 = arith.maximumf %29, %30 : vector<1x128xf32>
    %32 = vector.extract_strided_slice %6 {offsets = [1, 0], sizes = [1, 1], strides = [1, 1]} : vector<2x1xf32> to vector<1x1xf32>
    %33 = vector.broadcast %32 : vector<1x1xf32> to vector<1x128xf32>
    %34 = arith.mulf %33, %31 : vector<1x128xf32>
    %35 = arith.addf %21, %34 : vector<1x128xf32>
    %c0_15 = arith.constant 0 : index
    %36 = memref.load %arg7[%c0_15] : memref<1xf32, #tpu.memory_space<smem>>
    %37 = vector.broadcast %36 : f32 to vector<1x128xf32>
    %38 = arith.addf %35, %37 : vector<1x128xf32>
    %39 = arith.negf %38 : vector<1x128xf32>
    %40 = math.exp %39 : vector<1x128xf32>
    %cst_16 = arith.constant 1.000000e+00 : f32
    %41 = vector.broadcast %cst_16 : f32 to vector<1x128xf32>
    %42 = arith.addf %41, %40 : vector<1x128xf32>
    %43 = arith.divf %41, %42 : vector<1x128xf32>
    %44 = vector.broadcast %43 : vector<1x128xf32> to vector<16x128xf32>
    %45 = arith.mulf %1, %44 : vector<16x128xf32>
    %c0_17 = arith.constant 0 : index
    %c0_18 = arith.constant 0 : index
    %c0_19 = arith.constant 0 : index
    %46 = vector.load %arg8[%c0_17, %c0_18, %c0_19] : memref<1x16x128xf32, #tpu.memory_space<vmem>>, vector<1x16x128xf32>
    %47 = vector.shape_cast %46 : vector<1x16x128xf32> to vector<16x128xf32>
    %48 = vector.shape_cast %45 : vector<16x128xf32> to vector<1x16x128xf32>
    tpu.vector_store %arg8[%c0_17, %c0_18, %c0_19], %48 {strides = array<i32>} : memref<1x16x128xf32, #tpu.memory_space<vmem>>, vector<1x16x128xf32>,
    return
  }
  func.func @transform_0(%arg0: i32, %arg1: i32) -> (i32, i32, i32) {
    %c0_i32 = arith.constant 0 : i32
    %c0_i32_0 = arith.constant 0 : i32
    return %arg0, %c0_i32, %arg1 : i32, i32, i32
  }
  func.func @transform_1(%arg0: i32, %arg1: i32) -> (i32, i32, i32) {
    %c0_i32 = arith.constant 0 : i32
    %c0_i32_0 = arith.constant 0 : i32
    return %arg0, %c0_i32, %arg1 : i32, i32, i32
  }
  func.func @transform_2(%arg0: i32, %arg1: i32) -> (i32, i32) {
    %c0_i32 = arith.constant 0 : i32
    %c0_i32_0 = arith.constant 0 : i32
    %c0_i32_1 = arith.constant 0 : i32
    return %c0_i32, %c0_i32_0 : i32, i32
  }
  func.func @transform_3(%arg0: i32, %arg1: i32) -> (i32, i32) {
    %c0_i32 = arith.constant 0 : i32
    %c0_i32_0 = arith.constant 0 : i32
    %c0_i32_1 = arith.constant 0 : i32
    return %c0_i32, %c0_i32_0 : i32, i32
  }
  func.func @transform_4(%arg0: i32, %arg1: i32) -> (i32, i32) {
    %c0_i32 = arith.constant 0 : i32
    %c0_i32_0 = arith.constant 0 : i32
    %c0_i32_1 = arith.constant 0 : i32
    return %c0_i32, %c0_i32_0 : i32, i32
  }
  func.func @transform_5(%arg0: i32, %arg1: i32) -> i32 {
    %c0_i32 = arith.constant 0 : i32
    %c0_i32_0 = arith.constant 0 : i32
    return %c0_i32 : i32
  }
  func.func @transform_6(%arg0: i32, %arg1: i32) -> (i32, i32, i32) {
    %c0_i32 = arith.constant 0 : i32
    %c0_i32_0 = arith.constant 0 : i32
    return %arg0, %c0_i32, %arg1 : i32, i32, i32
  }
}

</mosaic_0001>

<llo_original>
// kernel: _pa_forward_seg.1
$region0: #{_pa_forward_seg.1}
  #allocation0 [shape = 'u32[]', space=smem, size = 0x4, offset = 0x4, fixed_abs, tag = 'smem constant byte address 0x4 - core index']
  #allocation1 [shape = 'u32[144,128]{1,0:T(1,128)}', space=vmem, size = 0x12000, scoped, tag = 'internal scratch']
  #allocation2 [shape = 'f32[1]{0:T(128)S(6)}', space=smem, size = 0x200, scoped, tag = 'scoped memory for _pa_forward_seg.1']
  %s0 = inlined_call_operand.vmem [shape: f32[2,16,256], index: 0, kind: input, shape index: {}]
  %s1 = inlined_call_operand.vmem [shape: f32[2,16,256], index: 1, kind: input, shape index: {}]
  %s2 = inlined_call_operand.vmem [shape: f32[16,2], index: 2, kind: input, shape index: {}]
  %s3 = inlined_call_operand.vmem [shape: f32[2,1], index: 3, kind: input, shape index: {}]
  %s4 = inlined_call_operand.vmem [shape: f32[2,1], index: 4, kind: input, shape index: {}]
  %s5 = inlined_call_operand.<no memory space> [shape: f32[1], index: 5, kind: input, shape index: {}]
  %s6 = inlined_call_operand.vmem [shape: f32[2,16,256], index: 6, kind: output, shape index: {}]
  %s7 = sld [smem:[#allocation0]]
  $region167: #{_pa_forward_seg.1} parent=0
    _
  %s9 = ssub.s32 1, %s7
  %s10 = scalar_select 0, %s9, %s7
  %11 = sst [smem:[#allocation2]] %s5
  $region1: #{_pa_forward_seg.1} parent=0
    #allocation3 [shape = 'u8[16384]{0}', space=vmem, size = 0x4000, scoped, tag = 'input window, operand 0']
    #allocation4 [shape = 'u8[16384]{0}', space=vmem, size = 0x4000, scoped, tag = 'input window, operand 1']
    #allocation5 [shape = 'u8[16384]{0}', space=vmem, size = 0x4000, scoped, tag = 'output window, operand 0']
    loop: start=0, step=1, limit=6
    $region2: #{_pa_forward_seg.1} parent=1 // loop_pre_header
      _
    $region3: #{_pa_forward_seg.1} parent=1 // loop_header
      %s13 = sphi 0, %s17
      %p14 = scmp.ge.s32.totalorder %s13, 6
      %s20 = sphi 0, %s32
      %s21 = sphi 0, %s28
      %s22 = sphi 0, %s20
      %s23 = sphi 0, %s21
      %s24 = sphi 0, %s22
      %s25 = sphi 0, %s23
      %s37 = sphi 0, %s39
      %s40 = sphi 0, %s37
      %s41 = sphi 0, %s40
      %s57 = sphi 0, %s41
      %s65 = sphi 0, %s67
      %s68 = sphi 0, %s65
      %s69 = sphi 0, %s68
      %s85 = sphi 0, %s69
      %s89 = sphi 0, %s89
      %s91 = sphi 0, %s89
      %s92 = sphi 0, %s91
      %s106 = sphi 0, %s92
      %s110 = sphi 0, %s110
      %s112 = sphi 0, %s110
      %s113 = sphi 0, %s112
      %s127 = sphi 0, %s113
      %s131 = sphi 0, %s131
      %s133 = sphi 0, %s131
      %s134 = sphi 0, %s133
      %s148 = sphi 0, %s134
      %s152 = sphi 0, %s152
      %s154 = sphi 0, %s152
      %s155 = sphi 0, %s154
      %s169 = sphi 0, %s155
      %s177 = sphi 0, %s179
      %s180 = sphi 0, %s177
      %s181 = sphi 0, %s180
      %s197 = sphi 0, %s181
    $region4: #{_pa_forward_seg.1} parent=1 // loop_header_branch
      %16 = sbr.rel (%p14) target = $region8
    $region5: #{_pa_forward_seg.1} parent=1 // loop_body
      %s18 = ssub.s32 %s13, 1
      %s19 = ssub.s32 %s13, 2
      %s26 = sadd.s32 1, %s21
      %p27 = scmp.ge.s32.totalorder %s26, 2
      %s28 = scalar_select %p27, 0, %s26
      %s29 = sadd.s32 1, %s20
      %s30 = scalar_select %p27, %s29, %s20
      %p31 = scmp.ge.s32.totalorder %s30, 2
      %s32 = scalar_select %p31, 0, %s30
      %s33 = ssub.s32 %s20, %s32
      %s34 = ssub.s32 %s21, %s28
      %s35 = sor.u32 %s33, %s34
      %p36 = scmp.eq.s32.totalorder %s35, 0
      %s38 = sadd.s32 %s37, 1
      %s39 = scalar_select %p36, %s37, %s38
      %p42 = pneg %p36
      %p43 = scmp.eq.s32.totalorder %s13, 3
      %p44 = por %p42, %p43
      %p45 = scmp.ne.s32.totalorder %s37, %s40
      %p46 = scmp.eq.s32.totalorder %s13, 0
      %p47 = por %p45, %p46
      %p48 = scmp.ne.s32.totalorder %s37, %s40
      %p49 = scmp.eq.s32.totalorder %s18, 3
      %p50 = por %p48, %p49
      %p51 = scmp.ne.s32.totalorder %s40, %s41
      %p52 = scmp.eq.s32.totalorder %s18, 0
      %p53 = por %p51, %p52
      %p54 = scmp.ne.s32.totalorder %s40, %s41
      %p55 = scmp.eq.s32.totalorder %s19, 3
      %p56 = por %p54, %p55
      %p58 = scmp.ne.s32.totalorder %s41, %s57
      %p59 = scmp.eq.s32.totalorder %s19, 0
      %p60 = por %p58, %p59
      %s61 = ssub.s32 %s20, %s32
      %s62 = ssub.s32 %s21, %s28
      %s63 = sor.u32 %s61, %s62
      %p64 = scmp.eq.s32.totalorder %s63, 0
      %s66 = sadd.s32 %s65, 1
      %s67 = scalar_select %p64, %s65, %s66
      %p70 = pneg %p64
      %p71 = scmp.eq.s32.totalorder %s13, 3
      %p72 = por %p70, %p71
      %p73 = scmp.ne.s32.totalorder %s65, %s68
      %p74 = scmp.eq.s32.totalorder %s13, 0
      %p75 = por %p73, %p74
      %p76 = scmp.ne.s32.totalorder %s65, %s68
      %p77 = scmp.eq.s32.totalorder %s18, 3
      %p78 = por %p76, %p77
      %p79 = scmp.ne.s32.totalorder %s68, %s69
      %p80 = scmp.eq.s32.totalorder %s18, 0
      %p81 = por %p79, %p80
      %p82 = scmp.ne.s32.totalorder %s68, %s69
      %p83 = scmp.eq.s32.totalorder %s19, 3
      %p84 = por %p82, %p83
      %p86 = scmp.ne.s32.totalorder %s69, %s85
      %p87 = scmp.eq.s32.totalorder %s19, 0
      %p88 = por %p86, %p87
      %s90 = sadd.s32 %s89, 1
      %p93 = scmp.eq.s32.totalorder %s13, 3
      %p94 = scmp.ne.s32.totalorder %s89, %s91
      %p95 = scmp.eq.s32.totalorder %s13, 0
      %p96 = por %p94, %p95
      %p97 = scmp.ne.s32.totalorder %s89, %s91
      %p98 = scmp.eq.s32.totalorder %s18, 3
      %p99 = por %p97, %p98
      %p100 = scmp.ne.s32.totalorder %s91, %s92
      %p101 = scmp.eq.s32.totalorder %s18, 0
      %p102 = por %p100, %p101
      %p103 = scmp.ne.s32.totalorder %s91, %s92
      %p104 = scmp.eq.s32.totalorder %s19, 3
      %p105 = por %p103, %p104
      %p107 = scmp.ne.s32.totalorder %s92, %s106
      %p108 = scmp.eq.s32.totalorder %s19, 0
      %p109 = por %p107, %p108
      %s111 = sadd.s32 %s110, 1
      %p114 = scmp.eq.s32.totalorder %s13, 3
      %p115 = scmp.ne.s32.totalorder %s110, %s112
      %p116 = scmp.eq.s32.totalorder %s13, 0
      %p117 = por %p115, %p116
      %p118 = scmp.ne.s32.totalorder %s110, %s112
      %p119 = scmp.eq.s32.totalorder %s18, 3
      %p120 = por %p118, %p119
      %p121 = scmp.ne.s32.totalorder %s112, %s113
      %p122 = scmp.eq.s32.totalorder %s18, 0
      %p123 = por %p121, %p122
      %p124 = scmp.ne.s32.totalorder %s112, %s113
      %p125 = scmp.eq.s32.totalorder %s19, 3
      %p126 = por %p124, %p125
      %p128 = scmp.ne.s32.totalorder %s113, %s127
      %p129 = scmp.eq.s32.totalorder %s19, 0
      %p130 = por %p128, %p129
      %s132 = sadd.s32 %s131, 1
      %p135 = scmp.eq.s32.totalorder %s13, 3
      %p136 = scmp.ne.s32.totalorder %s131, %s133
      %p137 = scmp.eq.s32.totalorder %s13, 0
      %p138 = por %p136, %p137
      %p139 = scmp.ne.s32.totalorder %s131, %s133
      %p140 = scmp.eq.s32.totalorder %s18, 3
      %p141 = por %p139, %p140
      %p142 = scmp.ne.s32.totalorder %s133, %s134
      %p143 = scmp.eq.s32.totalorder %s18, 0
      %p144 = por %p142, %p143
      %p145 = scmp.ne.s32.totalorder %s133, %s134
      %p146 = scmp.eq.s32.totalorder %s19, 3
      %p147 = por %p145, %p146
      %p149 = scmp.ne.s32.totalorder %s134, %s148
      %p150 = scmp.eq.s32.totalorder %s19, 0
      %p151 = por %p149, %p150
      %s153 = sadd.s32 %s152, 1
      %p156 = scmp.eq.s32.totalorder %s13, 3
      %p157 = scmp.ne.s32.totalorder %s152, %s154
      %p158 = scmp.eq.s32.totalorder %s13, 0
      %p159 = por %p157, %p158
      %p160 = scmp.ne.s32.totalorder %s152, %s154
      %p161 = scmp.eq.s32.totalorder %s18, 3
      %p162 = por %p160, %p161
      %p163 = scmp.ne.s32.totalorder %s154, %s155
      %p164 = scmp.eq.s32.totalorder %s18, 0
      %p165 = por %p163, %p164
      %p166 = scmp.ne.s32.totalorder %s154, %s155
      %p167 = scmp.eq.s32.totalorder %s19, 3
      %p168 = por %p166, %p167
      %p170 = scmp.ne.s32.totalorder %s155, %s169
      %p171 = scmp.eq.s32.totalorder %s19, 0
      %p172 = por %p170, %p171
      %s173 = ssub.s32 %s20, %s32
      %s174 = ssub.s32 %s21, %s28
      %s175 = sor.u32 %s173, %s174
      %p176 = scmp.eq.s32.totalorder %s175, 0
      %s178 = sadd.s32 %s177, 1
      %s179 = scalar_select %p176, %s177, %s178
      %p182 = pneg %p176
      %p183 = scmp.eq.s32.totalorder %s13, 3
      %p184 = por %p182, %p183
      %p185 = scmp.ne.s32.totalorder %s177, %s180
      %p186 = scmp.eq.s32.totalorder %s13, 0
      %p187 = por %p185, %p186
      %p188 = scmp.ne.s32.totalorder %s177, %s180
      %p189 = scmp.eq.s32.totalorder %s18, 3
      %p190 = por %p188, %p189
      %p191 = scmp.ne.s32.totalorder %s180, %s181
      %p192 = scmp.eq.s32.totalorder %s18, 0
      %p193 = por %p191, %p192
      %p194 = scmp.ne.s32.totalorder %s180, %s181
      %p195 = scmp.eq.s32.totalorder %s19, 3
      %p196 = por %p194, %p195
      %p198 = scmp.ne.s32.totalorder %s181, %s197
      %p199 = scmp.eq.s32.totalorder %s19, 0
      %p200 = por %p198, %p199
      %p201 = scmp.le.s32.totalorder 1, %s13
      %p202 = scmp.lt.s32.totalorder %s13, 5
      %p203 = pnand %p201, %p202
      %p204 = pneg %p203
      // Predicated region
      $region9: #{_pa_forward_seg.1} parent=5 // pred_check
        _
      $region10: #{_pa_forward_seg.1} parent=5 // pred_check_branch
        %206 = sbr.rel (%p203) target = $region12
      $region11: #{_pa_forward_seg.1} parent=5 // pred_region
        %s207 = ssub.s32 %s13, 1
        // Predicated region
        $region13: #{_pa_forward_seg.1} parent=11 // pred_check
          %p208 = pneg %p102
        $region14: #{_pa_forward_seg.1} parent=11 // pred_check_branch
          %210 = sbr.rel (%p208) target = $region16
        $region15: #{_pa_forward_seg.1} parent=11 // pred_region
          _
        $region16: #{_pa_forward_seg.1} parent=11 // pred_fallthru
          _
        // Predicated region
        $region17: #{_pa_forward_seg.1} parent=11 // pred_check
          %p211 = pneg %p123
        $region18: #{_pa_forward_seg.1} parent=11 // pred_check_branch
          %213 = sbr.rel (%p211) target = $region20
        $region19: #{_pa_forward_seg.1} parent=11 // pred_region
          _
        $region20: #{_pa_forward_seg.1} parent=11 // pred_fallthru
          _
        // Predicated region
        $region21: #{_pa_forward_seg.1} parent=11 // pred_check
          %p214 = pneg %p144
        $region22: #{_pa_forward_seg.1} parent=11 // pred_check_branch
          %216 = sbr.rel (%p214) target = $region24
        $region23: #{_pa_forward_seg.1} parent=11 // pred_region
          _
        $region24: #{_pa_forward_seg.1} parent=11 // pred_fallthru
          _
        // Predicated region
        $region25: #{_pa_forward_seg.1} parent=11 // pred_check
          %p217 = pneg %p165
        $region26: #{_pa_forward_seg.1} parent=11 // pred_check_branch
          %219 = sbr.rel (%p217) target = $region28
        $region27: #{_pa_forward_seg.1} parent=11 // pred_region
          _
        $region28: #{_pa_forward_seg.1} parent=11 // pred_fallthru
          _
      $region12: #{_pa_forward_seg.1} parent=5 // pred_fallthru
        _
      %p220 = scmp.lt.s32.totalorder %s13, 4
      // Predicated region
      $region29: #{_pa_forward_seg.1} parent=5 // pred_check
        %p221 = pneg %p220
      $region30: #{_pa_forward_seg.1} parent=5 // pred_check_branch
        %223 = sbr.rel (%p221) target = $region32
      $region31: #{_pa_forward_seg.1} parent=5 // pred_region
        // Predicated region
        $region33: #{_pa_forward_seg.1} parent=31 // pred_check
          %p224 = pneg %p47
        $region34: #{_pa_forward_seg.1} parent=31 // pred_check_branch
          %226 = sbr.rel (%p224) target = $region36
        $region35: #{_pa_forward_seg.1} parent=31 // pred_region
          %s227 = sand.u32 %s37, 1
          %s228 = sand.u32 %s37, 1
          %s229 = smul.addr %s228, 16
          %s230 = scalar_lea.vmem [#allocation3], %s229
          %s231 = smul.addr %s20, 4
          %s232 = sadd.s32 %s21, %s231
          %s233 = smul.addr %s232, 8
          %s234 = scalar_lea.vmem %s0, %s233
          // Predicated region
          $region37: #{_pa_forward_seg.1} parent=35 // pred_check
            _
          $region38: #{_pa_forward_seg.1} parent=35 // pred_check_branch
            %236 = sbr.rel (0) target = $region40
          $region39: #{_pa_forward_seg.1} parent=35 // pred_region
            // Predicated region
            $region41: #{_pa_forward_seg.1} parent=39 // pred_check
              _
            $region42: #{_pa_forward_seg.1} parent=39 // pred_check_branch
              %238 = sbr.rel (0) target = $region44
            $region43: #{_pa_forward_seg.1} parent=39 // pred_region
              // Predicated region
              $region56: #{_pa_forward_seg.1} parent=43 // pred_check
                _
              $region57: #{_pa_forward_seg.1} parent=43 // pred_check_branch
                %255 = sbr.rel (0) target = $region59
              $region58: #{_pa_forward_seg.1} parent=43 // pred_region
                loop: start=0, step=1, limit=1
                $region60: #{_pa_forward_seg.1} parent=58 // loop_pre_header
                  _
                $region61: #{_pa_forward_seg.1} parent=58 // loop_header
                  %s257 = sphi 0, %s261
                  %p258 = scmp.ge.s32.totalorder %s257, 1
                  %s262 = sphi %s234, %s234
                  %s263 = sphi %s230, %s230
                $region62: #{_pa_forward_seg.1} parent=58 // loop_header_branch
                  %260 = sbr.rel (%p258) target = $region66
                $region63: #{_pa_forward_seg.1} parent=58 // loop_body
                  %v264 = vld [vmem:[%s262] sm:$0xff]
                  %265 = vst [vmem:[%s263] sm:$0xff] %v264
                  %v266 = vld [vmem:[%s262 + $0x10] sm:$0xff]
                  %267 = vst [vmem:[%s263 + $0x8] sm:$0xff] %v266
                $region64: #{_pa_forward_seg.1} parent=58 // loop_footer
                  %s261 = sadd.s32 1, %s257
                $region65: #{_pa_forward_seg.1} parent=58 // loop_footer_branch
                  %256 = sbr.rel target = $region61
                $region66: #{_pa_forward_seg.1} parent=58 // loop_exit
                  _
              $region59: #{_pa_forward_seg.1} parent=43 // pred_fallthru
                _
              // Predicated region
              $region67: #{_pa_forward_seg.1} parent=43 // pred_check
                _
              $region68: #{_pa_forward_seg.1} parent=43 // pred_check_branch
                %269 = sbr.rel target = $region70
              $region69: #{_pa_forward_seg.1} parent=43 // pred_region
                _
              $region70: #{_pa_forward_seg.1} parent=43 // pred_fallthru
                _
            $region44: #{_pa_forward_seg.1} parent=39 // pred_fallthru
              _
            // Predicated region
            $region45: #{_pa_forward_seg.1} parent=39 // pred_check
              _
            $region46: #{_pa_forward_seg.1} parent=39 // pred_check_branch
              %240 = sbr.rel target = $region48
            $region47: #{_pa_forward_seg.1} parent=39 // pred_region
              loop: start=0, step=1, limit=1
              $region49: #{_pa_forward_seg.1} parent=47 // loop_pre_header
                _
              $region50: #{_pa_forward_seg.1} parent=47 // loop_header
                %s243 = sphi 0, %s247
                %p244 = scmp.ge.s32.totalorder %s243, 1
                %s248 = sphi %s234, %s234
                %s249 = sphi %s230, %s230
              $region51: #{_pa_forward_seg.1} parent=47 // loop_header_branch
                %246 = sbr.rel (%p244) target = $region55
              $region52: #{_pa_forward_seg.1} parent=47 // loop_body
                %v250 = vld [vmem:[%s248] sm:$0xff]
                %251 = vst [vmem:[%s249] sm:$0xff] %v250
                %v252 = vld [vmem:[%s248 + $0x10] sm:$0xff]
                %253 = vst [vmem:[%s249 + $0x8] sm:$0xff] %v252
              $region53: #{_pa_forward_seg.1} parent=47 // loop_footer
                %s247 = sadd.s32 1, %s243
              $region54: #{_pa_forward_seg.1} parent=47 // loop_footer_branch
                %242 = sbr.rel target = $region50
              $region55: #{_pa_forward_seg.1} parent=47 // loop_exit
                _
            $region48: #{_pa_forward_seg.1} parent=39 // pred_fallthru
              _
          $region40: #{_pa_forward_seg.1} parent=35 // pred_fallthru
            _
          %270 = vnop
        $region36: #{_pa_forward_seg.1} parent=31 // pred_fallthru
          _
        // Predicated region
        $region71: #{_pa_forward_seg.1} parent=31 // pred_check
          %p271 = pneg %p75
        $region72: #{_pa_forward_seg.1} parent=31 // pred_check_branch
          %273 = sbr.rel (%p271) target = $region74
        $region73: #{_pa_forward_seg.1} parent=31 // pred_region
          %s274 = sand.u32 %s65, 1
          %s275 = sand.u32 %s65, 1
          %s276 = smul.addr %s275, 16
          %s277 = scalar_lea.vmem [#allocation4], %s276
          %s278 = smul.addr %s20, 4
          %s279 = sadd.s32 %s21, %s278
          %s280 = smul.addr %s279, 8
          %s281 = scalar_lea.vmem %s1, %s280
          // Predicated region
          $region75: #{_pa_forward_seg.1} parent=73 // pred_check
            _
          $region76: #{_pa_forward_seg.1} parent=73 // pred_check_branch
            %283 = sbr.rel (0) target = $region78
          $region77: #{_pa_forward_seg.1} parent=73 // pred_region
            // Predicated region
            $region79: #{_pa_forward_seg.1} parent=77 // pred_check
              _
            $region80: #{_pa_forward_seg.1} parent=77 // pred_check_branch
              %285 = sbr.rel (0) target = $region82
            $region81: #{_pa_forward_seg.1} parent=77 // pred_region
              // Predicated region
              $region94: #{_pa_forward_seg.1} parent=81 // pred_check
                _
              $region95: #{_pa_forward_seg.1} parent=81 // pred_check_branch
                %302 = sbr.rel (0) target = $region97
              $region96: #{_pa_forward_seg.1} parent=81 // pred_region
                loop: start=0, step=1, limit=1
                $region98: #{_pa_forward_seg.1} parent=96 // loop_pre_header
                  _
                $region99: #{_pa_forward_seg.1} parent=96 // loop_header
                  %s304 = sphi 0, %s308
                  %p305 = scmp.ge.s32.totalorder %s304, 1
                  %s309 = sphi %s281, %s281
                  %s310 = sphi %s277, %s277
                $region100: #{_pa_forward_seg.1} parent=96 // loop_header_branch
                  %307 = sbr.rel (%p305) target = $region104
                $region101: #{_pa_forward_seg.1} parent=96 // loop_body
                  %v311 = vld [vmem:[%s309] sm:$0xff]
                  %312 = vst [vmem:[%s310] sm:$0xff] %v311
                  %v313 = vld [vmem:[%s309 + $0x10] sm:$0xff]
                  %314 = vst [vmem:[%s310 + $0x8] sm:$0xff] %v313
                $region102: #{_pa_forward_seg.1} parent=96 // loop_footer
                  %s308 = sadd.s32 1, %s304
                $region103: #{_pa_forward_seg.1} parent=96 // loop_footer_branch
                  %303 = sbr.rel target = $region99
                $region104: #{_pa_forward_seg.1} parent=96 // loop_exit
                  _
              $region97: #{_pa_forward_seg.1} parent=81 // pred_fallthru
                _
              // Predicated region
              $region105: #{_pa_forward_seg.1} parent=81 // pred_check
                _
              $region106: #{_pa_forward_seg.1} parent=81 // pred_check_branch
                %316 = sbr.rel target = $region108
              $region107: #{_pa_forward_seg.1} parent=81 // pred_region
                _
              $region108: #{_pa_forward_seg.1} parent=81 // pred_fallthru
                _
            $region82: #{_pa_forward_seg.1} parent=77 // pred_fallthru
              _
            // Predicated region
            $region83: #{_pa_forward_seg.1} parent=77 // pred_check
              _
            $region84: #{_pa_forward_seg.1} parent=77 // pred_check_branch
              %287 = sbr.rel target = $region86
            $region85: #{_pa_forward_seg.1} parent=77 // pred_region
              loop: start=0, step=1, limit=1
              $region87: #{_pa_forward_seg.1} parent=85 // loop_pre_header
                _
              $region88: #{_pa_forward_seg.1} parent=85 // loop_header
                %s290 = sphi 0, %s294
                %p291 = scmp.ge.s32.totalorder %s290, 1
                %s295 = sphi %s281, %s281
                %s296 = sphi %s277, %s277
              $region89: #{_pa_forward_seg.1} parent=85 // loop_header_branch
                %293 = sbr.rel (%p291) target = $region93
              $region90: #{_pa_forward_seg.1} parent=85 // loop_body
                %v297 = vld [vmem:[%s295] sm:$0xff]
                %298 = vst [vmem:[%s296] sm:$0xff] %v297
                %v299 = vld [vmem:[%s295 + $0x10] sm:$0xff]
                %300 = vst [vmem:[%s296 + $0x8] sm:$0xff] %v299
              $region91: #{_pa_forward_seg.1} parent=85 // loop_footer
                %s294 = sadd.s32 1, %s290
              $region92: #{_pa_forward_seg.1} parent=85 // loop_footer_branch
                %289 = sbr.rel target = $region88
              $region93: #{_pa_forward_seg.1} parent=85 // loop_exit
                _
            $region86: #{_pa_forward_seg.1} parent=77 // pred_fallthru
              _
          $region78: #{_pa_forward_seg.1} parent=73 // pred_fallthru
            _
          %317 = vnop
        $region74: #{_pa_forward_seg.1} parent=31 // pred_fallthru
          _
      $region32: #{_pa_forward_seg.1} parent=5 // pred_fallthru
        _
      %p318 = scmp.le.s32.totalorder 1, %s13
      %p319 = scmp.lt.s32.totalorder %s13, 5
      %p320 = pnand %p318, %p319
      %p321 = pneg %p320
      // Predicated region
      $region109: #{_pa_forward_seg.1} parent=5 // pred_check
        _
      $region110: #{_pa_forward_seg.1} parent=5 // pred_check_branch
        %323 = sbr.rel (%p320) target = $region112
      $region111: #{_pa_forward_seg.1} parent=5 // pred_region
        %s324 = ssub.s32 %s13, 1
        %s325 = sand.u32 %s40, 1
        %s326 = sand.u32 %s40, 1
        %s327 = smul.addr %s326, 16
        %s328 = scalar_lea.vmem [#allocation3], %s327
        // Predicated region
        $region113: #{_pa_forward_seg.1} parent=111 // pred_check
          %p329 = pneg %p53
        $region114: #{_pa_forward_seg.1} parent=111 // pred_check_branch
          %331 = sbr.rel (%p329) target = $region116
        $region115: #{_pa_forward_seg.1} parent=111 // pred_region
          _
        $region116: #{_pa_forward_seg.1} parent=111 // pred_fallthru
          _
        %s332 = sand.u32 %s68, 1
        %s333 = sand.u32 %s68, 1
        %s334 = smul.addr %s333, 16
        %s335 = scalar_lea.vmem [#allocation4], %s334
        // Predicated region
        $region117: #{_pa_forward_seg.1} parent=111 // pred_check
          %p336 = pneg %p81
        $region118: #{_pa_forward_seg.1} parent=111 // pred_check_branch
          %338 = sbr.rel (%p336) target = $region120
        $region119: #{_pa_forward_seg.1} parent=111 // pred_region
          _
        $region120: #{_pa_forward_seg.1} parent=111 // pred_fallthru
          _
        %s339 = sand.u32 %s40, 1
        %s340 = sand.u32 %s40, 1
        %s341 = smul.addr %s340, 16
        %s342 = scalar_lea.vmem [#allocation3], %s341
        %p343 = pneg %p53
        %p344 = pneg %p50
        %s345 = sand.u32 %s68, 1
        %s346 = sand.u32 %s68, 1
        %s347 = smul.addr %s346, 16
        %s348 = scalar_lea.vmem [#allocation4], %s347
        %p349 = pneg %p81
        %p350 = pneg %p78
        %p351 = pneg %p102
        %p352 = pneg %p99
        %p353 = pneg %p123
        %p354 = pneg %p120
        %p355 = pneg %p144
        %p356 = pneg %p141
        %p357 = pneg %p165
        %p358 = pneg %p162
        %p359 = pneg %p193
        %p360 = pneg %p190
        %s361 = sand.u32 %s180, 1
        %s362 = sand.u32 %s180, 1
        %s363 = smul.addr %s362, 16
        %s364 = scalar_lea.vmem [#allocation5], %s363
        %v365 = vld [vmem:[%s328] sm:$0xff]
        %v366 = vld [vmem:[%s328 + $0x8] sm:$0xff]
        %v367 = vld [vmem:[%s335] sm:$0xff]
        %v368 = vld [vmem:[%s335 + $0x8] sm:$0xff]
        %v369 = vld [vmem:[%s2] sm:$0xff]
        %v370 = vld [vmem:[%s2 + $0x8] sm:$0xff]
        %v371 = vld [vmem:[%s3] sm:$0x3]
        %v372 = vld [vmem:[%s4] sm:$0x3]
        %374 = vset.pattern.permute.xlu0 0
        %375 = vperm.xlu0 %374, %v369
        %v376 = vpop.permute.xlu0 %375
        %379 = vset.pattern.permute.xlu0 0
        %380 = vperm.xlu0 %379, %v370
        %v381 = vpop.permute.xlu0 %380
        %v383 = vmul.f32 %v376, %v367
        %v384 = vmul.f32 %v381, %v368
        %v385 = vadd.f32 %v383, %v384
        %v386 = vrot.slane %v385, 4
        %v387 = vadd.f32 %v385, %v386
        %v388 = vrot.slane %v387, 2
        %v389 = vadd.f32 %v387, %v388
        %v390 = vrot.slane %v389, 1
        %v391 = vadd.f32 %v389, %v390
        %393 = vset.pattern.permute.xlu0 0
        %394 = vperm.xlu0 %393, %v371
        %v395 = vpop.permute.xlu0 %394
        %v397 = vadd.f32 %v391, %v395
        %v398 = vmax.f32 %v397, 0.0
        %400 = vset.pattern.permute.xlu0 0
        %401 = vperm.xlu0 %400, %v372
        %v402 = vpop.permute.xlu0 %401
        %v404 = vmul.f32 %v402, %v398
        %v405 = vadd.f32 %v404, 0.0
        %406 = vset.pattern.permute.xlu0 1
        %407 = vperm.xlu0 %406, %v369
        %v408 = vpop.permute.xlu0 %407
        %410 = vset.pattern.permute.xlu0 1
        %411 = vperm.xlu0 %410, %v370
        %v412 = vpop.permute.xlu0 %411
        %v414 = vmul.f32 %v408, %v367
        %v415 = vmul.f32 %v412, %v368
        %v416 = vadd.f32 %v414, %v415
        %v417 = vrot.slane %v416, 4
        %v418 = vadd.f32 %v416, %v417
        %v419 = vrot.slane %v418, 2
        %v420 = vadd.f32 %v418, %v419
        %v421 = vrot.slane %v420, 1
        %v422 = vadd.f32 %v420, %v421
        %v423 = vadd.f32 %v422, %v395
        %v424 = vmax.f32 %v423, 0.0
        %v425 = vmul.f32 %v402, %v424
        %v427 = vrot.slane %v425, 1
        %v429 = vadd.f32 %v405, %v427
        %s430 = sld [smem:[#allocation2]]
        %v431 = vstv %s430
        %v432 = vadd.f32 %v429, %v431
        %v433 = vxor.u32 %v432, 2147483648
        %v434 = vmul.f32 %v433, 1.442695
        %v435 = vpow.pop %v434
        %v436 = vadd.f32 %v435, 1.0
        %v437 = vrcp.pop %v436
        %v438 = vmul.f32 1.0, %v437
        %v439 = vlaneseq
        %v440 = vshrl.u32 %v439, 7
        %v441 = vsub.s32 0, %v440
        %v442 = vrot.slane %v438, %v441
        %v443 = vmul.f32 %v365, %v442
        %v444 = vmul.f32 %v366, %v442
        %445 = vst [vmem:[%s364] sm:$0xff] %v443
        %446 = vst [vmem:[%s364 + $0x8] sm:$0xff] %v444
        %s447 = sand.u32 %s180, 1
        %s448 = sand.u32 %s180, 1
        %s449 = smul.addr %s448, 16
        %s450 = scalar_lea.vmem [#allocation5], %s449
        // Predicated region
        $region121: #{_pa_forward_seg.1} parent=111 // pred_check
          %p451 = pneg %p190
        $region122: #{_pa_forward_seg.1} parent=111 // pred_check_branch
          %453 = sbr.rel (%p451) target = $region124
        $region123: #{_pa_forward_seg.1} parent=111 // pred_region
          %s454 = smul.addr %s22, 4
          %s455 = sadd.s32 %s23, %s454
          %s456 = smul.addr %s455, 8
          %s457 = scalar_lea.vmem %s6, %s456
          // Predicated region
          $region125: #{_pa_forward_seg.1} parent=123 // pred_check
            _
          $region126: #{_pa_forward_seg.1} parent=123 // pred_check_branch
            %459 = sbr.rel (0) target = $region128
          $region127: #{_pa_forward_seg.1} parent=123 // pred_region
            // Predicated region
            $region129: #{_pa_forward_seg.1} parent=127 // pred_check
              _
            $region130: #{_pa_forward_seg.1} parent=127 // pred_check_branch
              %461 = sbr.rel (0) target = $region132
            $region131: #{_pa_forward_seg.1} parent=127 // pred_region
              // Predicated region
              $region144: #{_pa_forward_seg.1} parent=131 // pred_check
                _
              $region145: #{_pa_forward_seg.1} parent=131 // pred_check_branch
                %478 = sbr.rel (0) target = $region147
              $region146: #{_pa_forward_seg.1} parent=131 // pred_region
                loop: start=0, step=1, limit=1
                $region148: #{_pa_forward_seg.1} parent=146 // loop_pre_header
                  _
                $region149: #{_pa_forward_seg.1} parent=146 // loop_header
                  %s480 = sphi 0, %s484
                  %p481 = scmp.ge.s32.totalorder %s480, 1
                  %s485 = sphi %s450, %s450
                  %s486 = sphi %s457, %s457
                $region150: #{_pa_forward_seg.1} parent=146 // loop_header_branch
                  %483 = sbr.rel (%p481) target = $region154
                $region151: #{_pa_forward_seg.1} parent=146 // loop_body
                  %v487 = vld [vmem:[%s485] sm:$0xff]
                  %488 = vst [vmem:[%s486] sm:$0xff] %v487
                  %v489 = vld [vmem:[%s485 + $0x8] sm:$0xff]
                  %490 = vst [vmem:[%s486 + $0x10] sm:$0xff] %v489
                $region152: #{_pa_forward_seg.1} parent=146 // loop_footer
                  %s484 = sadd.s32 1, %s480
                $region153: #{_pa_forward_seg.1} parent=146 // loop_footer_branch
                  %479 = sbr.rel target = $region149
                $region154: #{_pa_forward_seg.1} parent=146 // loop_exit
                  _
              $region147: #{_pa_forward_seg.1} parent=131 // pred_fallthru
                _
              // Predicated region
              $region155: #{_pa_forward_seg.1} parent=131 // pred_check
                _
              $region156: #{_pa_forward_seg.1} parent=131 // pred_check_branch
                %492 = sbr.rel target = $region158
              $region157: #{_pa_forward_seg.1} parent=131 // pred_region
                _
              $region158: #{_pa_forward_seg.1} parent=131 // pred_fallthru
                _
            $region132: #{_pa_forward_seg.1} parent=127 // pred_fallthru
              _
            // Predicated region
            $region133: #{_pa_forward_seg.1} parent=127 // pred_check
              _
            $region134: #{_pa_forward_seg.1} parent=127 // pred_check_branch
              %463 = sbr.rel target = $region136
            $region135: #{_pa_forward_seg.1} parent=127 // pred_region
              loop: start=0, step=1, limit=1
              $region137: #{_pa_forward_seg.1} parent=135 // loop_pre_header
                _
              $region138: #{_pa_forward_seg.1} parent=135 // loop_header
                %s466 = sphi 0, %s470
                %p467 = scmp.ge.s32.totalorder %s466, 1
                %s471 = sphi %s450, %s450
                %s472 = sphi %s457, %s457
              $region139: #{_pa_forward_seg.1} parent=135 // loop_header_branch
                %469 = sbr.rel (%p467) target = $region143
              $region140: #{_pa_forward_seg.1} parent=135 // loop_body
                %v473 = vld [vmem:[%s471] sm:$0xff]
                %474 = vst [vmem:[%s472] sm:$0xff] %v473
                %v475 = vld [vmem:[%s471 + $0x8] sm:$0xff]
                %476 = vst [vmem:[%s472 + $0x10] sm:$0xff] %v475
              $region141: #{_pa_forward_seg.1} parent=135 // loop_footer
                %s470 = sadd.s32 1, %s466
              $region142: #{_pa_forward_seg.1} parent=135 // loop_footer_branch
                %465 = sbr.rel target = $region138
              $region143: #{_pa_forward_seg.1} parent=135 // loop_exit
                _
            $region136: #{_pa_forward_seg.1} parent=127 // pred_fallthru
              _
          $region128: #{_pa_forward_seg.1} parent=123 // pred_fallthru
            _
          %493 = vnop
        $region124: #{_pa_forward_seg.1} parent=111 // pred_fallthru
          _
      $region112: #{_pa_forward_seg.1} parent=5 // pred_fallthru
        _
      %p494 = scmp.le.s32.totalorder 2, %s13
      // Predicated region
      $region159: #{_pa_forward_seg.1} parent=5 // pred_check
        %p495 = pneg %p494
      $region160: #{_pa_forward_seg.1} parent=5 // pred_check_branch
        %497 = sbr.rel (%p495) target = $region162
      $region161: #{_pa_forward_seg.1} parent=5 // pred_region
        %s498 = ssub.s32 %s13, 2
        // Predicated region
        $region163: #{_pa_forward_seg.1} parent=161 // pred_check
          %p499 = pneg %p196
        $region164: #{_pa_forward_seg.1} parent=161 // pred_check_branch
          %501 = sbr.rel (%p499) target = $region166
        $region165: #{_pa_forward_seg.1} parent=161 // pred_region
          %s502 = sand.u32 %s181, 1
          %s503 = sand.u32 %s181, 1
          %s504 = smul.addr %s503, 16
          %s505 = scalar_lea.vmem [#allocation5], %s504
        $region166: #{_pa_forward_seg.1} parent=161 // pred_fallthru
          _
      $region162: #{_pa_forward_seg.1} parent=5 // pred_fallthru
        _
    $region6: #{_pa_forward_seg.1} parent=1 // loop_footer
      %s17 = sadd.s32 1, %s13
    $region7: #{_pa_forward_seg.1} parent=1 // loop_footer_branch
      %12 = sbr.rel target = $region3
    $region8: #{_pa_forward_seg.1} parent=1 // loop_exit
      _

</llo_original>
